<compile_context>
chip_gen: v7x
topology: tpu7x:2x2x1
jax: 0.10.0
libtpu: 0.0.40
codegen_flags: <defaults>
</compile_context>

<pallas_src>
import jax
import jax.numpy as jnp
from jax.experimental import pallas as pl
from jax.experimental.pallas import tpu as pltpu

_TABLE_DTYPE = jnp.bfloat16


def _mf_kernel(uidx_ref, iidx_ref, utab_ref, itab_ref, o_ref):
    """One grid step over TB batch rows.

    uidx_ref / iidx_ref : (1, TB) int32 indices (batch on lanes)
    utab_ref            : (Fa, n_users) bf16 VMEM-resident transposed table
    itab_ref            : (Fa, n_items) bf16 VMEM-resident transposed table
    o_ref               : (1, TB) f32 lane-dense output block
    """
    tb = uidx_ref.shape[-1]
    n_users = utab_ref.shape[1]
    n_items = itab_ref.shape[1]
    tdt = utab_ref.dtype

    u_idx = uidx_ref[...]   # (1, TB)
    i_idx = iidx_ref[...]   # (1, TB)

    # One-hot selection matrices (0/1 is exact in bf16): rows = table entries
    # (contraction dim), cols = batch (lanes). Pure VPU compares.
    u_oh = (jax.lax.broadcasted_iota(jnp.int32, (n_users, tb), 0) == u_idx).astype(tdt)
    i_oh = (jax.lax.broadcasted_iota(jnp.int32, (n_items, tb), 0) == i_idx).astype(tdt)

    # Gather TB rows from each table with one bf16 MXU matmul per table,
    # accumulating in f32.
    ue_t = jnp.dot(utab_ref[...], u_oh, preferred_element_type=jnp.float32)  # (Fa, TB)
    ie_t = jnp.dot(itab_ref[...], i_oh, preferred_element_type=jnp.float32)  # (Fa, TB)

    # Elementwise product + feature (sublane) reduction -> (1, TB) lane-dense.
    o_ref[...] = jnp.sum(ue_t * ie_t, axis=0, keepdims=True)


def prepare_tables(params, with_bias=False, table_dtype=_TABLE_DTYPE):
    """One-time table prep, hoisted out of the forward path.

    Folds biases into the feature dim, zero-pads Fa to the sublane-packing
    granularity, transposes so the in-kernel gather is a plain (Fa, n) @ (n, TB)
    matmul with the batch on lanes, and casts to bf16 (MXU-native).
    """
    user_emb = params["user_embeddings"]   # (n_users, F)
    item_emb = params["item_embeddings"]   # (n_items, F)
    n_users = user_emb.shape[0]
    n_items = item_emb.shape[0]

    if with_bias:
        # [ue, ub, 1] . [ie, 1, ib] = ue.ie + ub + ib
        user_tab = jnp.concatenate(
            [user_emb, params["user_biases"], jnp.ones((n_users, 1), user_emb.dtype)], axis=1)
        item_tab = jnp.concatenate(
            [item_emb, jnp.ones((n_items, 1), item_emb.dtype), params["item_biases"]], axis=1)
    else:
        user_tab, item_tab = user_emb, item_emb

    # Zero-pad the (augmented) feature dim to the sublane-packing granularity
    # (16 for bf16) so the MXU lhs and the (Fa, TB) intermediates tile cleanly.
    fa = user_tab.shape[1]
    sub = 16 if table_dtype == jnp.bfloat16 else 8
    fa_pad = -(-fa // sub) * sub
    if fa_pad != fa:
        user_tab = jnp.pad(user_tab, ((0, 0), (0, fa_pad - fa)))
        item_tab = jnp.pad(item_tab, ((0, 0), (0, fa_pad - fa)))

    return {
        "user_tab_t": user_tab.T.astype(table_dtype),   # (Fa, n_users)
        "item_tab_t": item_tab.T.astype(table_dtype),   # (Fa, n_items)
    }


def mf_forward(user_indices, item_indices, tables, block_b=None):
    """Pallas MF forward. indices: int (B,); tables: from prepare_tables().

    Returns (B, 1) float32 predictions.
    """
    user_tab_t = tables["user_tab_t"]   # (Fa, n_users)
    item_tab_t = tables["item_tab_t"]   # (Fa, n_items)
    fa, n_users = user_tab_t.shape
    n_items = item_tab_t.shape[1]
    tab_bytes = user_tab_t.dtype.itemsize
    B = user_indices.shape[0]

    # Adaptive batch tile: amortize the ~600-cycle per-grid-step overhead with
    # big lane-dense blocks, bounded by a ~4 MiB budget for the in-kernel
    # one-hot intermediates.
    if block_b is None:
        onehot_rows = n_users + n_items
        cap = (4 << 20) // max(onehot_rows * tab_bytes, 1)
        cap = max(128, min(4096, (cap // 128) * 128))
        block_b = int(min(cap, max(128, pl.next_power_of_2(max(B, 1)))))
        # v7x megacore: split large batches into >= 2 grid steps so both
        # TensorCores get work on the "parallel" axis.
        if B > 256 and pl.cdiv(B, block_b) < 2:
            block_b = max(128, block_b // 2)

    num_blocks = pl.cdiv(B, block_b)
    bp = num_blocks * block_b

    # NOTE: out-of-range / negative indices yield an all-zero one-hot column
    # (prediction 0, no bias) instead of erroring like torch.nn.Embedding.
    u_idx = jnp.pad(user_indices.astype(jnp.int32), (0, bp - B)).reshape(num_blocks, 1, block_b)
    i_idx = jnp.pad(item_indices.astype(jnp.int32), (0, bp - B)).reshape(num_blocks, 1, block_b)

    # TODO(synk): tables stay VMEM-resident here; for catalogs whose bf16 tables
    # exceed ~40 MiB (v7x, 64 MiB VMEM/TC) / ~90 MiB (v5e/v6e), switch to a
    # per-row DMA-gather path (indices as scalar prefetch, tables at pl.ANY,
    # make_async_copy with >=4-deep buffering); the crossover is earlier on v5e
    # where the weaker MXU makes the one-hot overcompute bind first.

    # Explicit scoped-VMEM budget: single-buffered resident tables + streamed
    # index/output blocks + in-kernel intermediates + headroom.  Raising the
    # limit matters on v5e (16 MiB default scoped limit); the 64 MiB cap keeps
    # it valid on v7x.
    table_bytes = (user_tab_t.size + item_tab_t.size) * tab_bytes
    stream_bytes = 2 * (2 * block_b * 4) + 2 * (block_b * 4)
    onehot_bytes = (n_users + n_items) * block_b * tab_bytes
    inter_bytes = 2 * fa * block_b * 4
    vmem_limit = table_bytes + stream_bytes + onehot_bytes + inter_bytes + (4 << 20)
    vmem_limit = int(min(max(vmem_limit, 32 << 20), 64 << 20))

    idx_spec = pl.BlockSpec((None, 1, block_b), lambda b: (b, 0, 0))
    out_spec = pl.BlockSpec((None, 1, block_b), lambda b: (b, 0, 0))

    def _table_specs(single_buffer):
        if single_buffer:
            # Resident tables never change their block index -> single-buffer
            # them to halve their VMEM footprint (matters on v7x's 64 MiB).
            return (pl.BlockSpec((fa, n_users), lambda b: (0, 0),
                                 pipeline_mode=pl.Buffered(1)),
                    pl.BlockSpec((fa, n_items), lambda b: (0, 0),
                                 pipeline_mode=pl.Buffered(1)))
        return (pl.BlockSpec((fa, n_users), lambda b: (0, 0)),
                pl.BlockSpec((fa, n_items), lambda b: (0, 0)))

    def _run(single_buffer):
        utab_spec, itab_spec = _table_specs(single_buffer)
        grid_spec = pltpu.PrefetchScalarGridSpec(
            num_scalar_prefetch=0,
            grid=(num_blocks,),
            in_specs=[idx_spec, idx_spec, utab_spec, itab_spec],
            out_specs=out_spec,
        )
        return pl.pallas_call(
            _mf_kernel,
            out_shape=jax.ShapeDtypeStruct((num_blocks, 1, block_b), jnp.float32),
            grid_spec=grid_spec,
            compiler_params=pltpu.CompilerParams(
                dimension_semantics=("parallel",),
                vmem_limit_bytes=vmem_limit),
        )(u_idx, i_idx, user_tab_t, item_tab_t)

    try:
        out = _run(single_buffer=True)
    except Exception:
        # pipeline_mode / pl.Buffered not supported on this JAX build for
        # pallas_call BlockSpecs -> fall back to default double buffering.
        out = _run(single_buffer=False)

    return out.reshape(bp)[:B].reshape(B, 1)


def init_params(key, n_users, n_items, n_features, with_bias=False):
    k1, k2, k3, k4 = jax.random.split(key, 4)
    params = {
        # torch: .normal_(0, 0.01)
        "user_embeddings": 0.01 * jax.random.normal(k1, (n_users, n_features), jnp.float32),
        "item_embeddings": 0.01 * jax.random.normal(k2, (n_items, n_features), jnp.float32),
    }
    if with_bias:
        # torch.nn.Embedding default init is N(0, 1)
        params["user_biases"] = jax.random.normal(k3, (n_users, 1), jnp.float32)
        params["item_biases"] = jax.random.normal(k4, (n_items, 1), jnp.float32)
    return params


def mf_reference(user_indices, item_indices, params, with_bias=False):
    ue = params["user_embeddings"][user_indices]
    ie = params["item_embeddings"][item_indices]
    pred = jnp.sum(ue * ie, axis=1, keepdims=True)
    if with_bias:
        pred = pred + params["user_biases"][user_indices] + params["item_biases"][item_indices]
    return pred


def _quantized_params(params):
    # Reference with the same bf16 table quantization the kernel uses
    # (accumulation stays f32 in both).
    return {k: v.astype(_TABLE_DTYPE).astype(jnp.float32) for k, v in params.items()}


if __name__ == "__main__":
    n_users, n_items, n_features, n_track_features = 50, 80, 32, 16
    B = 8

    key = jax.random.PRNGKey(0)
    k_idx_u, k_idx_i, k_params = jax.random.split(key, 3)
    user_idx = jax.random.randint(k_idx_u, (B,), 0, n_users, dtype=jnp.int32)
    item_idx = jax.random.randint(k_idx_i, (B,), 0, n_items, dtype=jnp.int32)

    ok = True
    for with_bias in (False, True):
        params = init_params(k_params, n_users, n_items, n_features, with_bias=with_bias)
        tables = prepare_tables(params, with_bias=with_bias)   # hoisted one-time prep
        out = jax.block_until_ready(mf_forward(user_idx, item_idx, tables))

        ref_q = mf_reference(user_idx, item_idx, _quantized_params(params), with_bias=with_bias)
        ref_f = mf_reference(user_idx, item_idx, params, with_bias=with_bias)
        ok = ok and out.shape == (B, 1)
        ok = ok and bool(jnp.allclose(out, ref_q, atol=1e-4, rtol=1e-3))   # exact-path check
        ok = ok and bool(jnp.allclose(out, ref_f, atol=5e-2, rtol=5e-2))   # bf16-quant sanity

    if ok:
        print("KERNEL_OK")
</pallas_src>

<mosaic_0001>
module attributes {stable_mosaic.version = 11 : i64} {
  func.func @_mf_kernel(%arg0: i32, %arg1: memref<1x1x128xi32, #tpu.memory_space<vmem>>, %arg2: memref<1x1x128xi32, #tpu.memory_space<vmem>>, %arg3: memref<32x50xbf16, #tpu.memory_space<vmem>>, %arg4: memref<32x80xbf16, #tpu.memory_space<vmem>>, %arg5: memref<1x1x128xf32, #tpu.memory_space<vmem>>) attributes {dimension_semantics = [#tpu.dimension_semantics<parallel>], iteration_bounds = array<i64: 1>, scalar_prefetch = 0 : i64, scratch_operands = 0 : i64, tpu.core_type = #tpu.core_type<tc>, window_params = [{transform_indices = @transform_0, window_bounds = array<i64: 1, 1, 128>}, {transform_indices = @transform_1, window_bounds = array<i64: 1, 1, 128>}, {pipeline_mode = #tpu.pipeline_mode<synchronous>, transform_indices = @transform_2, window_bounds = array<i64: 32, 50>}, {pipeline_mode = #tpu.pipeline_mode<synchronous>, transform_indices = @transform_3, window_bounds = array<i64: 32, 80>}, {transform_indices = @transform_4, window_bounds = array<i64: 1, 1, 128>}]} {
    %c0 = arith.constant 0 : index
    %c0_0 = arith.constant 0 : index
    %c0_1 = arith.constant 0 : index
    %0 = vector.load %arg1[%c0, %c0_0, %c0_1] : memref<1x1x128xi32, #tpu.memory_space<vmem>>, vector<1x1x128xi32>
    %1 = vector.shape_cast %0 : vector<1x1x128xi32> to vector<1x128xi32>
    %c0_2 = arith.constant 0 : index
    %c0_3 = arith.constant 0 : index
    %c0_4 = arith.constant 0 : index
    %2 = vector.load %arg2[%c0_2, %c0_3, %c0_4] : memref<1x1x128xi32, #tpu.memory_space<vmem>>, vector<1x1x128xi32>
    %3 = vector.shape_cast %2 : vector<1x1x128xi32> to vector<1x128xi32>
    %4 = tpu.iota {dimensions = array<i32: 0>} : vector<50x128xi32>
    %5 = vector.broadcast %1 : vector<1x128xi32> to vector<50x128xi32>
    %6 = arith.cmpi eq, %4, %5 : vector<50x128xi32>
    %7 = arith.extui %6 : vector<50x128xi1> to vector<50x128xi32>
    %8 = arith.sitofp %7 : vector<50x128xi32> to vector<50x128xf32>
    %9 = arith.truncf %8 : vector<50x128xf32> to vector<50x128xbf16>
    %10 = tpu.iota {dimensions = array<i32: 0>} : vector<80x128xi32>
    %11 = vector.broadcast %3 : vector<1x128xi32> to vector<80x128xi32>
    %12 = arith.cmpi eq, %10, %11 : vector<80x128xi32>
    %13 = arith.extui %12 : vector<80x128xi1> to vector<80x128xi32>
    %14 = arith.sitofp %13 : vector<80x128xi32> to vector<80x128xf32>
    %15 = arith.truncf %14 : vector<80x128xf32> to vector<80x128xbf16>
    %c0_5 = arith.constant 0 : index
    %c0_6 = arith.constant 0 : index
    %16 = vector.load %arg3[%c0_5, %c0_6] : memref<32x50xbf16, #tpu.memory_space<vmem>>, vector<32x50xbf16>
    %cst = arith.constant dense<0.000000e+00> : vector<32x128xf32>
    %17 = tpu.matmul %16, %9, %cst {dimension_numbers = #tpu.dot_dimension_numbers<[1], [0], [0], [1], [0, 0, 1, 1], [], []>} : vector<32x50xbf16>, vector<50x128xbf16>, vector<32x128xf32> -> vector<32x128xf32>
    %c0_7 = arith.constant 0 : index
    %c0_8 = arith.constant 0 : index
    %18 = vector.load %arg4[%c0_7, %c0_8] : memref<32x80xbf16, #tpu.memory_space<vmem>>, vector<32x80xbf16>
    %cst_9 = arith.constant dense<0.000000e+00> : vector<32x128xf32>
    %19 = tpu.matmul %18, %15, %cst_9 {dimension_numbers = #tpu.dot_dimension_numbers<[1], [0], [0], [1], [0, 0, 1, 1], [], []>} : vector<32x80xbf16>, vector<80x128xbf16>, vector<32x128xf32> -> vector<32x128xf32>
    %20 = arith.mulf %17, %19 : vector<32x128xf32>
    %cst_10 = arith.constant dense<0.000000e+00> : vector<128xf32>
    %21 = vector.multi_reduction <add>, %20, %cst_10 [0] : vector<32x128xf32> to vector<128xf32>
    %22 = vector.shape_cast %21 : vector<128xf32> to vector<1x128xf32>
    %c0_11 = arith.constant 0 : index
    %c0_12 = arith.constant 0 : index
    %c0_13 = arith.constant 0 : index
    %23 = vector.load %arg5[%c0_11, %c0_12, %c0_13] : memref<1x1x128xf32, #tpu.memory_space<vmem>>, vector<1x1x128xf32>
    %24 = vector.shape_cast %23 : vector<1x1x128xf32> to vector<1x128xf32>
    %25 = vector.shape_cast %22 : vector<1x128xf32> to vector<1x1x128xf32>
    tpu.vector_store %arg5[%c0_11, %c0_12, %c0_13], %25 {strides = array<i32>} : memref<1x1x128xf32, #tpu.memory_space<vmem>>, vector<1x1x128xf32>,
    return
  }
  func.func @transform_0(%arg0: i32) -> (i32, i32, i32) {
    %c0_i32 = arith.constant 0 : i32
    %c0_i32_0 = arith.constant 0 : i32
    %c0_i32_1 = arith.constant 0 : i32
    return %arg0, %c0_i32, %c0_i32_0 : i32, i32, i32
  }
  func.func @transform_1(%arg0: i32) -> (i32, i32, i32) {
    %c0_i32 = arith.constant 0 : i32
    %c0_i32_0 = arith.constant 0 : i32
    %c0_i32_1 = arith.constant 0 : i32
    return %arg0, %c0_i32, %c0_i32_0 : i32, i32, i32
  }
  func.func @transform_2(%arg0: i32) -> (i32, i32) {
    %c0_i32 = arith.constant 0 : i32
    %c0_i32_0 = arith.constant 0 : i32
    %c0_i32_1 = arith.constant 0 : i32
    return %c0_i32, %c0_i32_0 : i32, i32
  }
  func.func @transform_3(%arg0: i32) -> (i32, i32) {
    %c0_i32 = arith.constant 0 : i32
    %c0_i32_0 = arith.constant 0 : i32
    %c0_i32_1 = arith.constant 0 : i32
    return %c0_i32, %c0_i32_0 : i32, i32
  }
  func.func @transform_4(%arg0: i32) -> (i32, i32, i32) {
    %c0_i32 = arith.constant 0 : i32
    %c0_i32_0 = arith.constant 0 : i32
    %c0_i32_1 = arith.constant 0 : i32
    return %arg0, %c0_i32, %c0_i32_0 : i32, i32, i32
  }
}

module attributes {stable_mosaic.version = 11 : i64} {
  func.func @_mf_kernel(%arg0: i32, %arg1: memref<1x1x128xi32, #tpu.memory_space<vmem>>, %arg2: memref<1x1x128xi32, #tpu.memory_space<vmem>>, %arg3: memref<32x50xbf16, #tpu.memory_space<vmem>>, %arg4: memref<32x80xbf16, #tpu.memory_space<vmem>>, %arg5: memref<1x1x128xf32, #tpu.memory_space<vmem>>) attributes {dimension_semantics = [#tpu.dimension_semantics<parallel>], iteration_bounds = array<i64: 1>, scalar_prefetch = 0 : i64, scratch_operands = 0 : i64, tpu.core_type = #tpu.core_type<tc>, window_params = [{transform_indices = @transform_0, window_bounds = array<i64: 1, 1, 128>}, {transform_indices = @transform_1, window_bounds = array<i64: 1, 1, 128>}, {pipeline_mode = #tpu.pipeline_mode<synchronous>, transform_indices = @transform_2, window_bounds = array<i64: 32, 50>}, {pipeline_mode = #tpu.pipeline_mode<synchronous>, transform_indices = @transform_3, window_bounds = array<i64: 32, 80>}, {transform_indices = @transform_4, window_bounds = array<i64: 1, 1, 128>}]} {
    %c0 = arith.constant 0 : index
    %c0_0 = arith.constant 0 : index
    %c0_1 = arith.constant 0 : index
    %0 = vector.load %arg1[%c0, %c0_0, %c0_1] : memref<1x1x128xi32, #tpu.memory_space<vmem>>, vector<1x1x128xi32>
    %1 = vector.shape_cast %0 : vector<1x1x128xi32> to vector<1x128xi32>
    %c0_2 = arith.constant 0 : index
    %c0_3 = arith.constant 0 : index
    %c0_4 = arith.constant 0 : index
    %2 = vector.load %arg2[%c0_2, %c0_3, %c0_4] : memref<1x1x128xi32, #tpu.memory_space<vmem>>, vector<1x1x128xi32>
    %3 = vector.shape_cast %2 : vector<1x1x128xi32> to vector<1x128xi32>
    %4 = tpu.iota {dimensions = array<i32: 0>} : vector<50x128xi32>
    %5 = vector.broadcast %1 : vector<1x128xi32> to vector<50x128xi32>
    %6 = arith.cmpi eq, %4, %5 : vector<50x128xi32>
    %7 = arith.extui %6 : vector<50x128xi1> to vector<50x128xi32>
    %8 = arith.sitofp %7 : vector<50x128xi32> to vector<50x128xf32>
    %9 = arith.truncf %8 : vector<50x128xf32> to vector<50x128xbf16>
    %10 = tpu.iota {dimensions = array<i32: 0>} : vector<80x128xi32>
    %11 = vector.broadcast %3 : vector<1x128xi32> to vector<80x128xi32>
    %12 = arith.cmpi eq, %10, %11 : vector<80x128xi32>
    %13 = arith.extui %12 : vector<80x128xi1> to vector<80x128xi32>
    %14 = arith.sitofp %13 : vector<80x128xi32> to vector<80x128xf32>
    %15 = arith.truncf %14 : vector<80x128xf32> to vector<80x128xbf16>
    %c0_5 = arith.constant 0 : index
    %c0_6 = arith.constant 0 : index
    %16 = vector.load %arg3[%c0_5, %c0_6] : memref<32x50xbf16, #tpu.memory_space<vmem>>, vector<32x50xbf16>
    %cst = arith.constant dense<0.000000e+00> : vector<32x128xf32>
    %17 = tpu.matmul %16, %9, %cst {dimension_numbers = #tpu.dot_dimension_numbers<[1], [0], [0], [1], [0, 0, 1, 1], [], []>} : vector<32x50xbf16>, vector<50x128xbf16>, vector<32x128xf32> -> vector<32x128xf32>
    %c0_7 = arith.constant 0 : index
    %c0_8 = arith.constant 0 : index
    %18 = vector.load %arg4[%c0_7, %c0_8] : memref<32x80xbf16, #tpu.memory_space<vmem>>, vector<32x80xbf16>
    %cst_9 = arith.constant dense<0.000000e+00> : vector<32x128xf32>
    %19 = tpu.matmul %18, %15, %cst_9 {dimension_numbers = #tpu.dot_dimension_numbers<[1], [0], [0], [1], [0, 0, 1, 1], [], []>} : vector<32x80xbf16>, vector<80x128xbf16>, vector<32x128xf32> -> vector<32x128xf32>
    %20 = arith.mulf %17, %19 : vector<32x128xf32>
    %cst_10 = arith.constant dense<0.000000e+00> : vector<128xf32>
    %21 = vector.multi_reduction <add>, %20, %cst_10 [0] : vector<32x128xf32> to vector<128xf32>
    %22 = vector.shape_cast %21 : vector<128xf32> to vector<1x128xf32>
    %c0_11 = arith.constant 0 : index
    %c0_12 = arith.constant 0 : index
    %c0_13 = arith.constant 0 : index
    %23 = vector.load %arg5[%c0_11, %c0_12, %c0_13] : memref<1x1x128xf32, #tpu.memory_space<vmem>>, vector<1x1x128xf32>
    %24 = vector.shape_cast %23 : vector<1x1x128xf32> to vector<1x128xf32>
    %25 = vector.shape_cast %22 : vector<1x128xf32> to vector<1x1x128xf32>
    tpu.vector_store %arg5[%c0_11, %c0_12, %c0_13], %25 {strides = array<i32>} : memref<1x1x128xf32, #tpu.memory_space<vmem>>, vector<1x1x128xf32>,
    return
  }
  func.func @transform_0(%arg0: i32) -> (i32, i32, i32) {
    %c0_i32 = arith.constant 0 : i32
    %c0_i32_0 = arith.constant 0 : i32
    %c0_i32_1 = arith.constant 0 : i32
    return %arg0, %c0_i32, %c0_i32_0 : i32, i32, i32
  }
  func.func @transform_1(%arg0: i32) -> (i32, i32, i32) {
    %c0_i32 = arith.constant 0 : i32
    %c0_i32_0 = arith.constant 0 : i32
    %c0_i32_1 = arith.constant 0 : i32
    return %arg0, %c0_i32, %c0_i32_0 : i32, i32, i32
  }
  func.func @transform_2(%arg0: i32) -> (i32, i32) {
    %c0_i32 = arith.constant 0 : i32
    %c0_i32_0 = arith.constant 0 : i32
    %c0_i32_1 = arith.constant 0 : i32
    return %c0_i32, %c0_i32_0 : i32, i32
  }
  func.func @transform_3(%arg0: i32) -> (i32, i32) {
    %c0_i32 = arith.constant 0 : i32
    %c0_i32_0 = arith.constant 0 : i32
    %c0_i32_1 = arith.constant 0 : i32
    return %c0_i32, %c0_i32_0 : i32, i32
  }
  func.func @transform_4(%arg0: i32) -> (i32, i32, i32) {
    %c0_i32 = arith.constant 0 : i32
    %c0_i32_0 = arith.constant 0 : i32
    %c0_i32_1 = arith.constant 0 : i32
    return %arg0, %c0_i32, %c0_i32_0 : i32, i32, i32
  }
}

</mosaic_0001>

<llo_original>
// kernel: tpu_custom_call.1
$region0: #{tpu_custom_call.1}
  #allocation0 [shape = 'u32[]', space=smem, size = 0x4, offset = 0x4, fixed_abs, tag = 'smem constant byte address 0x4 - core index']
  #allocation1 [shape = 'u32[144,128]{1,0:T(1,128)}', space=vmem, size = 0x12000, scoped, tag = 'internal scratch']
  %s0 = inlined_call_operand.hbm [shape: s32[1,1,128], index: 0, kind: input, shape index: {}]
  %s1 = inlined_call_operand.vmem [shape: s32[1,1,128], index: 1, kind: input, shape index: {}]
  %s2 = inlined_call_operand.hbm [shape: bf16[32,50], index: 2, kind: input, shape index: {}]
  %s3 = inlined_call_operand.hbm [shape: bf16[32,80], index: 3, kind: input, shape index: {}]
  %s4 = inlined_call_operand.hbm [shape: f32[1,1,128], index: 4, kind: output, shape index: {}]
  %s5 = sld [smem:[#allocation0]]
  $region38: #{tpu_custom_call.1} parent=0
    _
  %s7 = ssub.s32 1, %s5
  %s8 = scalar_select 0, %s7, %s5
  $region1: #{tpu_custom_call.1} parent=0
    #allocation2 [shape = 'u8[512]{0}', space=vmem, size = 0x400, scoped, tag = 'input window, operand 0, single buffered']
    #allocation3 [shape = 's32[1]{0}', space=sflag, size = 0x4, scoped, tag = 'scoped memory for tpu_custom_call.1']
    #allocation4 [shape = 's32[1]{0}', space=sflag, size = 0x4, scoped, tag = 'scoped memory for tpu_custom_call.1']
    #allocation5 [shape = 'u8[8192]{0}', space=vmem, size = 0x2000, scoped, tag = 'input window, operand 2, single buffered']
    #allocation6 [shape = 's32[1]{0}', space=sflag, size = 0x4, scoped, tag = 'scoped memory for tpu_custom_call.1']
    #allocation7 [shape = 'u8[8192]{0}', space=vmem, size = 0x2000, scoped, tag = 'input window, operand 3, single buffered']
    #allocation8 [shape = 'u8[512]{0}', space=vmem, size = 0x400, scoped, tag = 'output window, operand 0, single buffered']
    %9 = vsyncpa [#allocation3], 0
    %10 = vsyncpa [#allocation6], 0
    %11 = vsyncpa [#allocation4], 0
    // Predicated region
    $region2: #{tpu_custom_call.1} parent=1 // pred_check
      _
    $region3: #{tpu_custom_call.1} parent=1 // pred_check_branch
      %13 = sbr.rel (0) target = $region5
    $region4: #{tpu_custom_call.1} parent=1 // pred_region
      %s15 = ssub.s32 16, 16
      %16 = vsyncadd [#allocation3], %s15
      %s18 = sshll.u32 [#allocation2], 4
      %s19 = int_to_ptr.vmem [resolvable:$true] %s18
      %21 = dma.hbm_to_vmem [thread:$0]  %s0, 16, %s19, [#allocation3]
    $region5: #{tpu_custom_call.1} parent=1 // pred_fallthru
      _
    // Predicated region
    $region6: #{tpu_custom_call.1} parent=1 // pred_check
      _
    $region7: #{tpu_custom_call.1} parent=1 // pred_check_branch
      %23 = sbr.rel (0) target = $region9
    $region8: #{tpu_custom_call.1} parent=1 // pred_region
      _
    $region9: #{tpu_custom_call.1} parent=1 // pred_fallthru
      _
    // Predicated region
    $region10: #{tpu_custom_call.1} parent=1 // pred_check
      _
    $region11: #{tpu_custom_call.1} parent=1 // pred_check_branch
      %25 = sbr.rel (0) target = $region13
    $region12: #{tpu_custom_call.1} parent=1 // pred_region
      %s27 = ssub.s32 256, 256
      %28 = vsyncadd [#allocation6], %s27
      %s29 = sshll.u32 [#allocation5], 4
      %s30 = int_to_ptr.vmem [resolvable:$true] %s29
      %35 = dma.hbm_to_vmem [thread:$0]  %s2, 256, %s30, [#allocation6], 64, 64, 4
    $region13: #{tpu_custom_call.1} parent=1 // pred_fallthru
      _
    // Predicated region
    $region14: #{tpu_custom_call.1} parent=1 // pred_check
      _
    $region15: #{tpu_custom_call.1} parent=1 // pred_check_branch
      %37 = sbr.rel (0) target = $region17
    $region16: #{tpu_custom_call.1} parent=1 // pred_region
      %s39 = ssub.s32 256, 256
      %40 = vsyncadd [#allocation6], %s39
      %s41 = sshll.u32 [#allocation7], 4
      %s42 = int_to_ptr.vmem [resolvable:$true] %s41
      %47 = dma.hbm_to_vmem [thread:$0]  %s3, 256, %s42, [#allocation6], 64, 64, 4
    $region17: #{tpu_custom_call.1} parent=1 // pred_fallthru
      _
    // Predicated region
    $region18: #{tpu_custom_call.1} parent=1 // pred_check
      _
    $region19: #{tpu_custom_call.1} parent=1 // pred_check_branch
      %49 = sbr.rel (0) target = $region21
    $region20: #{tpu_custom_call.1} parent=1 // pred_region
      %50 = dma.done [#allocation3], 16
    $region21: #{tpu_custom_call.1} parent=1 // pred_fallthru
      _
    // Predicated region
    $region22: #{tpu_custom_call.1} parent=1 // pred_check
      _
    $region23: #{tpu_custom_call.1} parent=1 // pred_check_branch
      %52 = sbr.rel (0) target = $region25
    $region24: #{tpu_custom_call.1} parent=1 // pred_region
      %53 = dma.done [#allocation6], 256
    $region25: #{tpu_custom_call.1} parent=1 // pred_fallthru
      _
    // Predicated region
    $region26: #{tpu_custom_call.1} parent=1 // pred_check
      _
    $region27: #{tpu_custom_call.1} parent=1 // pred_check_branch
      %55 = sbr.rel (0) target = $region29
    $region28: #{tpu_custom_call.1} parent=1 // pred_region
      %56 = dma.done [#allocation6], 256
    $region29: #{tpu_custom_call.1} parent=1 // pred_fallthru
      _
    %v58 = vld [vmem:[#allocation2] sm:$0x1]
    %v59 = vld [vmem:[%s1] sm:$0x1]
    %v60 = vlaneseq
    %v61 = vshrl.u32 %v60, 7
    %v62 = vadd.s32 %v61, 8
    %v63 = vadd.s32 %v61, 16
    %v64 = vadd.s32 %v61, 24
    %v65 = vadd.s32 %v61, 32
    %v66 = vadd.s32 %v61, 40
    %v67 = vadd.s32 %v61, 48
    %v68 = vlaneseq
    %v69 = vshrl.u32 %v68, 7
    %v70 = vsub.s32 0, %v69
    %v71 = vrot.slane %v58, %v70
    %vm72 = vcmp.eq.s32.totalorder %v61, %v71
    %vm73 = vcmp.eq.s32.totalorder %v62, %v71
    %vm74 = vcmp.eq.s32.totalorder %v63, %v71
    %vm75 = vcmp.eq.s32.totalorder %v64, %v71
    %vm76 = vcmp.eq.s32.totalorder %v65, %v71
    %vm77 = vcmp.eq.s32.totalorder %v66, %v71
    %vm78 = vcmp.eq.s32.totalorder %v67, %v71
    %v79 = vsel %vm72, 1, 0
    %v80 = vsel %vm73, 1, 0
    %v81 = vsel %vm74, 1, 0
    %v82 = vsel %vm75, 1, 0
    %v83 = vsel %vm76, 1, 0
    %v84 = vsel %vm77, 1, 0
    %v85 = vsel %vm78, 1, 0
    %v86 = vcvt.s32.f32 %v79
    %v87 = vcvt.s32.f32 %v80
    %v88 = vcvt.s32.f32 %v81
    %v89 = vcvt.s32.f32 %v82
    %v90 = vcvt.s32.f32 %v83
    %v91 = vcvt.s32.f32 %v84
    %v92 = vcvt.s32.f32 %v85
    %v93 = vpack.c.bf16 %v87, %v86
    %v94 = vpack.c.bf16 %v89, %v88
    %v95 = vpack.c.bf16 %v91, %v90
    %v96 = vpack.c.bf16 %v92, %v92
    %v97 = vadd.s32 %v61, 56
    %v98 = vadd.s32 %v61, 64
    %v99 = vadd.s32 %v61, 72
    %v100 = vlaneseq
    %v101 = vshrl.u32 %v100, 7
    %v102 = vsub.s32 0, %v101
    %v103 = vrot.slane %v59, %v102
    %vm104 = vcmp.eq.s32.totalorder %v61, %v103
    %vm105 = vcmp.eq.s32.totalorder %v62, %v103
    %vm106 = vcmp.eq.s32.totalorder %v63, %v103
    %vm107 = vcmp.eq.s32.totalorder %v64, %v103
    %vm108 = vcmp.eq.s32.totalorder %v65, %v103
    %vm109 = vcmp.eq.s32.totalorder %v66, %v103
    %vm110 = vcmp.eq.s32.totalorder %v67, %v103
    %vm111 = vcmp.eq.s32.totalorder %v97, %v103
    %vm112 = vcmp.eq.s32.totalorder %v98, %v103
    %vm113 = vcmp.eq.s32.totalorder %v99, %v103
    %v114 = vsel %vm104, 1, 0
    %v115 = vsel %vm105, 1, 0
    %v116 = vsel %vm106, 1, 0
    %v117 = vsel %vm107, 1, 0
    %v118 = vsel %vm108, 1, 0
    %v119 = vsel %vm109, 1, 0
    %v120 = vsel %vm110, 1, 0
    %v121 = vsel %vm111, 1, 0
    %v122 = vsel %vm112, 1, 0
    %v123 = vsel %vm113, 1, 0
    %v124 = vcvt.s32.f32 %v114
    %v125 = vcvt.s32.f32 %v115
    %v126 = vcvt.s32.f32 %v116
    %v127 = vcvt.s32.f32 %v117
    %v128 = vcvt.s32.f32 %v118
    %v129 = vcvt.s32.f32 %v119
    %v130 = vcvt.s32.f32 %v120
    %v131 = vcvt.s32.f32 %v121
    %v132 = vcvt.s32.f32 %v122
    %v133 = vcvt.s32.f32 %v123
    %v134 = vpack.c.bf16 %v125, %v124
    %v135 = vpack.c.bf16 %v127, %v126
    %v136 = vpack.c.bf16 %v129, %v128
    %v137 = vpack.c.bf16 %v131, %v130
    %v138 = vpack.c.bf16 %v133, %v132
    %v139 = vld [vmem:[#allocation5] sm:$0xf]
    %v140 = vld [vmem:[#allocation5 + $0x4] sm:$0xf]
    %v141 = vld [vmem:[#allocation5 + $0x8] sm:$0xf]
    %v142 = vld [vmem:[#allocation5 + $0xc] sm:$0xf]
    %v147 = vunpack.c.l.b16 %v139
    %v148 = vunpack.c.l.b16 %v140
    %v149 = vunpack.c.l.b16 %v141
    %v150 = vunpack.c.l.b16 %v142
    %v151 = vpack.c.b16 %v148, %v147
    %v152 = vpack.c.b16 %v150, %v149
    %vm153 = vcmask 408576
    %v155 = vsel %vm153, %v151, 0
    %v158 = vsel %vm153, %v152, 0
    %vm160 = vcmask 1040384
    %v162 = vsel %vm160, %v96, 0
    %164 = vmatprep.subr.bf16.mxu0 0
    %165 = vmatpush1.bf16.msra.mxu0 %v93
    %166 = vmatprep.subr.bf16.mxu0 0
    %167 = vmatpush1.bf16.msra.mxu0 %v94
    %168 = vmatprep.subr.bf16.mxu0 0
    %169 = vmatpush1.bf16.msra.mxu0 %v95
    %170 = vmatprep.subr.bf16.mxu0 0
    %171 = vmatpush1.bf16.msra.mxu0 %v162
    %172 = vmatprep.subr.bf16.mxu0 0
    %173 = vmatpush1.bf16.msra.mxu0 0
    %174 = vmatprep.subr.bf16.mxu0 0
    %175 = vmatpush1.bf16.msra.mxu0 0
    %176 = vmatprep.subr.bf16.mxu0 0
    %177 = vmatpush1.bf16.msra.mxu0 0
    %178 = vmatprep.subr.bf16.mxu0 0
    %179 = vmatpush1.bf16.msra.mxu0 0
    %180 = vmatprep.subr.bf16.mxu0 0
    %181 = vmatpush1.bf16.msra.mxu0 0
    %182 = vmatprep.subr.bf16.mxu0 0
    %183 = vmatpush1.bf16.msra.mxu0 0
    %184 = vmatprep.subr.bf16.mxu0 0
    %185 = vmatpush1.bf16.msra.mxu0 0
    %186 = vmatprep.subr.bf16.mxu0 0
    %187 = vmatpush1.bf16.msra.mxu0 0
    %188 = vmatprep.subr.bf16.mxu0 0
    %189 = vmatpush1.bf16.msra.mxu0 0
    %190 = vmatprep.subr.bf16.mxu0 0
    %191 = vmatpush1.bf16.msra.mxu0 0
    %192 = vmatprep.subr.bf16.mxu0 0
    %193 = vmatpush1.bf16.msra.mxu0 0
    %194 = vmatprep.subr.bf16.mxu0 0
    %195 = vmatpush1.bf16.msra.mxu0 0
    %196 = vmatprep.mubr.bf16.mxu0 0
    %197 = vmatmul.mubr.bf16.gmra.mrb[0].mxu0 %v155
    %v198 = vpop.f32.mrb[0].mxu0
    %v199 = vadd.f32 0.0, %v198
    %v200 = vpop.f32.mrb[0].mxu0
    %v201 = vpop.f32.mrb[0].mxu0
    %v202 = vadd.f32 0.0, %v201
    %v203 = vpop.f32.mrb[0].mxu0
    %204 = vmatprep.mubr.bf16.mxu0 0
    %205 = vmatmul.mubr.bf16.gmra.mrb[0].mxu0 %v158
    %v206 = vpop.f32.mrb[0].mxu0
    %v207 = vadd.f32 0.0, %v206
    %v208 = vpop.f32.mrb[0].mxu0
    %v209 = vpop.f32.mrb[0].mxu0
    %v210 = vadd.f32 0.0, %v209
    %v211 = vpop.f32.mrb[0].mxu0
    %212 = vdwg.mxu0
    %v213 = vld [vmem:[#allocation7] sm:$0xf]
    %v214 = vld [vmem:[#allocation7 + $0x4] sm:$0xf]
    %v215 = vld [vmem:[#allocation7 + $0x8] sm:$0xf]
    %v216 = vld [vmem:[#allocation7 + $0xc] sm:$0xf]
    %v221 = vunpack.c.l.b16 %v213
    %v222 = vunpack.c.l.b16 %v214
    %v223 = vunpack.c.l.b16 %v215
    %v224 = vunpack.c.l.b16 %v216
    %v225 = vpack.c.b16 %v222, %v221
    %v226 = vpack.c.b16 %v224, %v223
    %vm227 = vcmask 654336
    %v229 = vsel %vm227, %v225, 0
    %v232 = vsel %vm227, %v226, 0
    %234 = vmatprep.subr.bf16.mxu0 0
    %235 = vmatpush1.bf16.msra.mxu0 %v134
    %236 = vmatprep.subr.bf16.mxu0 0
    %237 = vmatpush1.bf16.msra.mxu0 %v135
    %238 = vmatprep.subr.bf16.mxu0 0
    %239 = vmatpush1.bf16.msra.mxu0 %v136
    %240 = vmatprep.subr.bf16.mxu0 0
    %241 = vmatpush1.bf16.msra.mxu0 %v137
    %242 = vmatprep.subr.bf16.mxu0 0
    %243 = vmatpush1.bf16.msra.mxu0 %v138
    %244 = vmatprep.subr.bf16.mxu0 0
    %245 = vmatpush1.bf16.msra.mxu0 0
    %246 = vmatprep.subr.bf16.mxu0 0
    %247 = vmatpush1.bf16.msra.mxu0 0
    %248 = vmatprep.subr.bf16.mxu0 0
    %249 = vmatpush1.bf16.msra.mxu0 0
    %250 = vmatprep.subr.bf16.mxu0 0
    %251 = vmatpush1.bf16.msra.mxu0 0
    %252 = vmatprep.subr.bf16.mxu0 0
    %253 = vmatpush1.bf16.msra.mxu0 0
    %254 = vmatprep.subr.bf16.mxu0 0
    %255 = vmatpush1.bf16.msra.mxu0 0
    %256 = vmatprep.subr.bf16.mxu0 0
    %257 = vmatpush1.bf16.msra.mxu0 0
    %258 = vmatprep.subr.bf16.mxu0 0
    %259 = vmatpush1.bf16.msra.mxu0 0
    %260 = vmatprep.subr.bf16.mxu0 0
    %261 = vmatpush1.bf16.msra.mxu0 0
    %262 = vmatprep.subr.bf16.mxu0 0
    %263 = vmatpush1.bf16.msra.mxu0 0
    %264 = vmatprep.subr.bf16.mxu0 0
    %265 = vmatpush1.bf16.msra.mxu0 0
    %266 = vmatprep.mubr.bf16.mxu0 0
    %267 = vmatmul.mubr.bf16.gmra.mrb[0].mxu0 %v229
    %v268 = vpop.f32.mrb[0].mxu0
    %v269 = vadd.f32 0.0, %v268
    %v270 = vpop.f32.mrb[0].mxu0
    %v271 = vpop.f32.mrb[0].mxu0
    %v272 = vadd.f32 0.0, %v271
    %v273 = vpop.f32.mrb[0].mxu0
    %274 = vmatprep.mubr.bf16.mxu0 0
    %275 = vmatmul.mubr.bf16.gmra.mrb[0].mxu0 %v232
    %v276 = vpop.f32.mrb[0].mxu0
    %v277 = vadd.f32 0.0, %v276
    %v278 = vpop.f32.mrb[0].mxu0
    %v279 = vpop.f32.mrb[0].mxu0
    %v280 = vadd.f32 0.0, %v279
    %v281 = vpop.f32.mrb[0].mxu0
    %282 = vdwg.mxu0
    %v283 = vmul.f32 %v199, %v269
    %v284 = vmul.f32 %v202, %v272
    %v285 = vmul.f32 %v207, %v277
    %v286 = vmul.f32 %v210, %v280
    %v287 = vadd.f32 %v283, %v284
    %v288 = vadd.f32 %v287, %v285
    %v289 = vadd.f32 %v288, %v286
    %v290 = vrot.slane %v289, 4
    %v291 = vadd.f32 %v289, %v290
    %v292 = vrot.slane %v291, 2
    %v293 = vadd.f32 %v291, %v292
    %v294 = vrot.slane %v293, 1
    %v295 = vadd.f32 %v293, %v294
    %296 = vst [vmem:[#allocation8] sm:$0x1] %v295
    // Predicated region
    $region30: #{tpu_custom_call.1} parent=1 // pred_check
      _
    $region31: #{tpu_custom_call.1} parent=1 // pred_check_branch
      %298 = sbr.rel (0) target = $region33
    $region32: #{tpu_custom_call.1} parent=1 // pred_region
      %s300 = ssub.s32 16, 16
      %301 = vsyncadd [#allocation4], %s300
      %s303 = sshll.u32 [#allocation8], 4
      %s304 = int_to_ptr.vmem [resolvable:$true] %s303
      %306 = dma.vmem_to_hbm [thread:$0]  %s304, 16, %s4, [#allocation4]
    $region33: #{tpu_custom_call.1} parent=1 // pred_fallthru
      _
    // Predicated region
    $region34: #{tpu_custom_call.1} parent=1 // pred_check
      _
    $region35: #{tpu_custom_call.1} parent=1 // pred_check_branch
      %308 = sbr.rel (0) target = $region37
    $region36: #{tpu_custom_call.1} parent=1 // pred_region
      %309 = dma.done [#allocation4], 16
    $region37: #{tpu_custom_call.1} parent=1 // pred_fallthru
      _
    %310 = vsyncpa [#allocation3], 1
    %311 = vsyncpa [#allocation6], 1
    %312 = vsyncpa [#allocation4], 1

// kernel: tpu_custom_call.1
$region0: #{tpu_custom_call.1}
  #allocation0 [shape = 'u32[]', space=smem, size = 0x4, offset = 0x4, fixed_abs, tag = 'smem constant byte address 0x4 - core index']
  #allocation1 [shape = 'u32[144,128]{1,0:T(1,128)}', space=vmem, size = 0x12000, scoped, tag = 'internal scratch']
  %s0 = inlined_call_operand.hbm [shape: s32[1,1,128], index: 0, kind: input, shape index: {}]
  %s1 = inlined_call_operand.vmem [shape: s32[1,1,128], index: 1, kind: input, shape index: {}]
  %s2 = inlined_call_operand.hbm [shape: bf16[32,50], index: 2, kind: input, shape index: {}]
  %s3 = inlined_call_operand.hbm [shape: bf16[32,80], index: 3, kind: input, shape index: {}]
  %s4 = inlined_call_operand.hbm [shape: f32[1,1,128], index: 4, kind: output, shape index: {}]
  %s5 = sld [smem:[#allocation0]]
  $region38: #{tpu_custom_call.1} parent=0
    _
  %s7 = ssub.s32 1, %s5
  %s8 = scalar_select 0, %s7, %s5
  $region1: #{tpu_custom_call.1} parent=0
    #allocation2 [shape = 'u8[512]{0}', space=vmem, size = 0x400, scoped, tag = 'input window, operand 0, single buffered']
    #allocation3 [shape = 's32[1]{0}', space=sflag, size = 0x4, scoped, tag = 'scoped memory for tpu_custom_call.1']
    #allocation4 [shape = 's32[1]{0}', space=sflag, size = 0x4, scoped, tag = 'scoped memory for tpu_custom_call.1']
    #allocation5 [shape = 'u8[8192]{0}', space=vmem, size = 0x2000, scoped, tag = 'input window, operand 2, single buffered']
    #allocation6 [shape = 's32[1]{0}', space=sflag, size = 0x4, scoped, tag = 'scoped memory for tpu_custom_call.1']
    #allocation7 [shape = 'u8[8192]{0}', space=vmem, size = 0x2000, scoped, tag = 'input window, operand 3, single buffered']
    #allocation8 [shape = 'u8[512]{0}', space=vmem, size = 0x400, scoped, tag = 'output window, operand 0, single buffered']
    %9 = vsyncpa [#allocation3], 0
    %10 = vsyncpa [#allocation6], 0
    %11 = vsyncpa [#allocation4], 0
    // Predicated region
    $region2: #{tpu_custom_call.1} parent=1 // pred_check
      _
    $region3: #{tpu_custom_call.1} parent=1 // pred_check_branch
      %13 = sbr.rel (0) target = $region5
    $region4: #{tpu_custom_call.1} parent=1 // pred_region
      %s15 = ssub.s32 16, 16
      %16 = vsyncadd [#allocation3], %s15
      %s18 = sshll.u32 [#allocation2], 4
      %s19 = int_to_ptr.vmem [resolvable:$true] %s18
      %21 = dma.hbm_to_vmem [thread:$0]  %s0, 16, %s19, [#allocation3]
    $region5: #{tpu_custom_call.1} parent=1 // pred_fallthru
      _
    // Predicated region
    $region6: #{tpu_custom_call.1} parent=1 // pred_check
      _
    $region7: #{tpu_custom_call.1} parent=1 // pred_check_branch
      %23 = sbr.rel (0) target = $region9
    $region8: #{tpu_custom_call.1} parent=1 // pred_region
      _
    $region9: #{tpu_custom_call.1} parent=1 // pred_fallthru
      _
    // Predicated region
    $region10: #{tpu_custom_call.1} parent=1 // pred_check
      _
    $region11: #{tpu_custom_call.1} parent=1 // pred_check_branch
      %25 = sbr.rel (0) target = $region13
    $region12: #{tpu_custom_call.1} parent=1 // pred_region
      %s27 = ssub.s32 256, 256
      %28 = vsyncadd [#allocation6], %s27
      %s29 = sshll.u32 [#allocation5], 4
      %s30 = int_to_ptr.vmem [resolvable:$true] %s29
      %35 = dma.hbm_to_vmem [thread:$0]  %s2, 256, %s30, [#allocation6], 64, 64, 4
    $region13: #{tpu_custom_call.1} parent=1 // pred_fallthru
      _
    // Predicated region
    $region14: #{tpu_custom_call.1} parent=1 // pred_check
      _
    $region15: #{tpu_custom_call.1} parent=1 // pred_check_branch
      %37 = sbr.rel (0) target = $region17
    $region16: #{tpu_custom_call.1} parent=1 // pred_region
      %s39 = ssub.s32 256, 256
      %40 = vsyncadd [#allocation6], %s39
      %s41 = sshll.u32 [#allocation7], 4
      %s42 = int_to_ptr.vmem [resolvable:$true] %s41
      %47 = dma.hbm_to_vmem [thread:$0]  %s3, 256, %s42, [#allocation6], 64, 64, 4
    $region17: #{tpu_custom_call.1} parent=1 // pred_fallthru
      _
    // Predicated region
    $region18: #{tpu_custom_call.1} parent=1 // pred_check
      _
    $region19: #{tpu_custom_call.1} parent=1 // pred_check_branch
      %49 = sbr.rel (0) target = $region21
    $region20: #{tpu_custom_call.1} parent=1 // pred_region
      %50 = dma.done [#allocation3], 16
    $region21: #{tpu_custom_call.1} parent=1 // pred_fallthru
      _
    // Predicated region
    $region22: #{tpu_custom_call.1} parent=1 // pred_check
      _
    $region23: #{tpu_custom_call.1} parent=1 // pred_check_branch
      %52 = sbr.rel (0) target = $region25
    $region24: #{tpu_custom_call.1} parent=1 // pred_region
      %53 = dma.done [#allocation6], 256
    $region25: #{tpu_custom_call.1} parent=1 // pred_fallthru
      _
    // Predicated region
    $region26: #{tpu_custom_call.1} parent=1 // pred_check
      _
    $region27: #{tpu_custom_call.1} parent=1 // pred_check_branch
      %55 = sbr.rel (0) target = $region29
    $region28: #{tpu_custom_call.1} parent=1 // pred_region
      %56 = dma.done [#allocation6], 256
    $region29: #{tpu_custom_call.1} parent=1 // pred_fallthru
      _
    %v58 = vld [vmem:[#allocation2] sm:$0x1]
    %v59 = vld [vmem:[%s1] sm:$0x1]
    %v60 = vlaneseq
    %v61 = vshrl.u32 %v60, 7
    %v62 = vadd.s32 %v61, 8
    %v63 = vadd.s32 %v61, 16
    %v64 = vadd.s32 %v61, 24
    %v65 = vadd.s32 %v61, 32
    %v66 = vadd.s32 %v61, 40
    %v67 = vadd.s32 %v61, 48
    %v68 = vlaneseq
    %v69 = vshrl.u32 %v68, 7
    %v70 = vsub.s32 0, %v69
    %v71 = vrot.slane %v58, %v70
    %vm72 = vcmp.eq.s32.totalorder %v61, %v71
    %vm73 = vcmp.eq.s32.totalorder %v62, %v71
    %vm74 = vcmp.eq.s32.totalorder %v63, %v71
    %vm75 = vcmp.eq.s32.totalorder %v64, %v71
    %vm76 = vcmp.eq.s32.totalorder %v65, %v71
    %vm77 = vcmp.eq.s32.totalorder %v66, %v71
    %vm78 = vcmp.eq.s32.totalorder %v67, %v71
    %v79 = vsel %vm72, 1, 0
    %v80 = vsel %vm73, 1, 0
    %v81 = vsel %vm74, 1, 0
    %v82 = vsel %vm75, 1, 0
    %v83 = vsel %vm76, 1, 0
    %v84 = vsel %vm77, 1, 0
    %v85 = vsel %vm78, 1, 0
    %v86 = vcvt.s32.f32 %v79
    %v87 = vcvt.s32.f32 %v80
    %v88 = vcvt.s32.f32 %v81
    %v89 = vcvt.s32.f32 %v82
    %v90 = vcvt.s32.f32 %v83
    %v91 = vcvt.s32.f32 %v84
    %v92 = vcvt.s32.f32 %v85
    %v93 = vpack.c.bf16 %v87, %v86
    %v94 = vpack.c.bf16 %v89, %v88
    %v95 = vpack.c.bf16 %v91, %v90
    %v96 = vpack.c.bf16 %v92, %v92
    %v97 = vadd.s32 %v61, 56
    %v98 = vadd.s32 %v61, 64
    %v99 = vadd.s32 %v61, 72
    %v100 = vlaneseq
    %v101 = vshrl.u32 %v100, 7
    %v102 = vsub.s32 0, %v101
    %v103 = vrot.slane %v59, %v102
    %vm104 = vcmp.eq.s32.totalorder %v61, %v103
    %vm105 = vcmp.eq.s32.totalorder %v62, %v103
    %vm106 = vcmp.eq.s32.totalorder %v63, %v103
    %vm107 = vcmp.eq.s32.totalorder %v64, %v103
    %vm108 = vcmp.eq.s32.totalorder %v65, %v103
    %vm109 = vcmp.eq.s32.totalorder %v66, %v103
    %vm110 = vcmp.eq.s32.totalorder %v67, %v103
    %vm111 = vcmp.eq.s32.totalorder %v97, %v103
    %vm112 = vcmp.eq.s32.totalorder %v98, %v103
    %vm113 = vcmp.eq.s32.totalorder %v99, %v103
    %v114 = vsel %vm104, 1, 0
    %v115 = vsel %vm105, 1, 0
    %v116 = vsel %vm106, 1, 0
    %v117 = vsel %vm107, 1, 0
    %v118 = vsel %vm108, 1, 0
    %v119 = vsel %vm109, 1, 0
    %v120 = vsel %vm110, 1, 0
    %v121 = vsel %vm111, 1, 0
    %v122 = vsel %vm112, 1, 0
    %v123 = vsel %vm113, 1, 0
    %v124 = vcvt.s32.f32 %v114
    %v125 = vcvt.s32.f32 %v115
    %v126 = vcvt.s32.f32 %v116
    %v127 = vcvt.s32.f32 %v117
    %v128 = vcvt.s32.f32 %v118
    %v129 = vcvt.s32.f32 %v119
    %v130 = vcvt.s32.f32 %v120
    %v131 = vcvt.s32.f32 %v121
    %v132 = vcvt.s32.f32 %v122
    %v133 = vcvt.s32.f32 %v123
    %v134 = vpack.c.bf16 %v125, %v124
    %v135 = vpack.c.bf16 %v127, %v126
    %v136 = vpack.c.bf16 %v129, %v128
    %v137 = vpack.c.bf16 %v131, %v130
    %v138 = vpack.c.bf16 %v133, %v132
    %v139 = vld [vmem:[#allocation5] sm:$0xf]
    %v140 = vld [vmem:[#allocation5 + $0x4] sm:$0xf]
    %v141 = vld [vmem:[#allocation5 + $0x8] sm:$0xf]
    %v142 = vld [vmem:[#allocation5 + $0xc] sm:$0xf]
    %v147 = vunpack.c.l.b16 %v139
    %v148 = vunpack.c.l.b16 %v140
    %v149 = vunpack.c.l.b16 %v141
    %v150 = vunpack.c.l.b16 %v142
    %v151 = vpack.c.b16 %v148, %v147
    %v152 = vpack.c.b16 %v150, %v149
    %vm153 = vcmask 408576
    %v155 = vsel %vm153, %v151, 0
    %v158 = vsel %vm153, %v152, 0
    %vm160 = vcmask 1040384
    %v162 = vsel %vm160, %v96, 0
    %164 = vmatprep.subr.bf16.mxu0 0
    %165 = vmatpush1.bf16.msra.mxu0 %v93
    %166 = vmatprep.subr.bf16.mxu0 0
    %167 = vmatpush1.bf16.msra.mxu0 %v94
    %168 = vmatprep.subr.bf16.mxu0 0
    %169 = vmatpush1.bf16.msra.mxu0 %v95
    %170 = vmatprep.subr.bf16.mxu0 0
    %171 = vmatpush1.bf16.msra.mxu0 %v162
    %172 = vmatprep.subr.bf16.mxu0 0
    %173 = vmatpush1.bf16.msra.mxu0 0
    %174 = vmatprep.subr.bf16.mxu0 0
    %175 = vmatpush1.bf16.msra.mxu0 0
    %176 = vmatprep.subr.bf16.mxu0 0
    %177 = vmatpush1.bf16.msra.mxu0 0
    %178 = vmatprep.subr.bf16.mxu0 0
    %179 = vmatpush1.bf16.msra.mxu0 0
    %180 = vmatprep.subr.bf16.mxu0 0
    %181 = vmatpush1.bf16.msra.mxu0 0
    %182 = vmatprep.subr.bf16.mxu0 0
    %183 = vmatpush1.bf16.msra.mxu0 0
    %184 = vmatprep.subr.bf16.mxu0 0
    %185 = vmatpush1.bf16.msra.mxu0 0
    %186 = vmatprep.subr.bf16.mxu0 0
    %187 = vmatpush1.bf16.msra.mxu0 0
    %188 = vmatprep.subr.bf16.mxu0 0
    %189 = vmatpush1.bf16.msra.mxu0 0
    %190 = vmatprep.subr.bf16.mxu0 0
    %191 = vmatpush1.bf16.msra.mxu0 0
    %192 = vmatprep.subr.bf16.mxu0 0
    %193 = vmatpush1.bf16.msra.mxu0 0
    %194 = vmatprep.subr.bf16.mxu0 0
    %195 = vmatpush1.bf16.msra.mxu0 0
    %196 = vmatprep.mubr.bf16.mxu0 0
    %197 = vmatmul.mubr.bf16.gmra.mrb[0].mxu0 %v155
    %v198 = vpop.f32.mrb[0].mxu0
    %v199 = vadd.f32 0.0, %v198
    %v200 = vpop.f32.mrb[0].mxu0
    %v201 = vpop.f32.mrb[0].mxu0
    %v202 = vadd.f32 0.0, %v201
    %v203 = vpop.f32.mrb[0].mxu0
    %204 = vmatprep.mubr.bf16.mxu0 0
    %205 = vmatmul.mubr.bf16.gmra.mrb[0].mxu0 %v158
    %v206 = vpop.f32.mrb[0].mxu0
    %v207 = vadd.f32 0.0, %v206
    %v208 = vpop.f32.mrb[0].mxu0
    %v209 = vpop.f32.mrb[0].mxu0
    %v210 = vadd.f32 0.0, %v209
    %v211 = vpop.f32.mrb[0].mxu0
    %212 = vdwg.mxu0
    %v213 = vld [vmem:[#allocation7] sm:$0xf]
    %v214 = vld [vmem:[#allocation7 + $0x4] sm:$0xf]
    %v215 = vld [vmem:[#allocation7 + $0x8] sm:$0xf]
    %v216 = vld [vmem:[#allocation7 + $0xc] sm:$0xf]
    %v221 = vunpack.c.l.b16 %v213
    %v222 = vunpack.c.l.b16 %v214
    %v223 = vunpack.c.l.b16 %v215
    %v224 = vunpack.c.l.b16 %v216
    %v225 = vpack.c.b16 %v222, %v221
    %v226 = vpack.c.b16 %v224, %v223
    %vm227 = vcmask 654336
    %v229 = vsel %vm227, %v225, 0
    %v232 = vsel %vm227, %v226, 0
    %234 = vmatprep.subr.bf16.mxu0 0
    %235 = vmatpush1.bf16.msra.mxu0 %v134
    %236 = vmatprep.subr.bf16.mxu0 0
    %237 = vmatpush1.bf16.msra.mxu0 %v135
    %238 = vmatprep.subr.bf16.mxu0 0
    %239 = vmatpush1.bf16.msra.mxu0 %v136
    %240 = vmatprep.subr.bf16.mxu0 0
    %241 = vmatpush1.bf16.msra.mxu0 %v137
    %242 = vmatprep.subr.bf16.mxu0 0
    %243 = vmatpush1.bf16.msra.mxu0 %v138
    %244 = vmatprep.subr.bf16.mxu0 0
    %245 = vmatpush1.bf16.msra.mxu0 0
    %246 = vmatprep.subr.bf16.mxu0 0
    %247 = vmatpush1.bf16.msra.mxu0 0
    %248 = vmatprep.subr.bf16.mxu0 0
    %249 = vmatpush1.bf16.msra.mxu0 0
    %250 = vmatprep.subr.bf16.mxu0 0
    %251 = vmatpush1.bf16.msra.mxu0 0
    %252 = vmatprep.subr.bf16.mxu0 0
    %253 = vmatpush1.bf16.msra.mxu0 0
    %254 = vmatprep.subr.bf16.mxu0 0
    %255 = vmatpush1.bf16.msra.mxu0 0
    %256 = vmatprep.subr.bf16.mxu0 0
    %257 = vmatpush1.bf16.msra.mxu0 0
    %258 = vmatprep.subr.bf16.mxu0 0
    %259 = vmatpush1.bf16.msra.mxu0 0
    %260 = vmatprep.subr.bf16.mxu0 0
    %261 = vmatpush1.bf16.msra.mxu0 0
    %262 = vmatprep.subr.bf16.mxu0 0
    %263 = vmatpush1.bf16.msra.mxu0 0
    %264 = vmatprep.subr.bf16.mxu0 0
    %265 = vmatpush1.bf16.msra.mxu0 0
    %266 = vmatprep.mubr.bf16.mxu0 0
    %267 = vmatmul.mubr.bf16.gmra.mrb[0].mxu0 %v229
    %v268 = vpop.f32.mrb[0].mxu0
    %v269 = vadd.f32 0.0, %v268
    %v270 = vpop.f32.mrb[0].mxu0
    %v271 = vpop.f32.mrb[0].mxu0
    %v272 = vadd.f32 0.0, %v271
    %v273 = vpop.f32.mrb[0].mxu0
    %274 = vmatprep.mubr.bf16.mxu0 0
    %275 = vmatmul.mubr.bf16.gmra.mrb[0].mxu0 %v232
    %v276 = vpop.f32.mrb[0].mxu0
    %v277 = vadd.f32 0.0, %v276
    %v278 = vpop.f32.mrb[0].mxu0
    %v279 = vpop.f32.mrb[0].mxu0
    %v280 = vadd.f32 0.0, %v279
    %v281 = vpop.f32.mrb[0].mxu0
    %282 = vdwg.mxu0
    %v283 = vmul.f32 %v199, %v269
    %v284 = vmul.f32 %v202, %v272
    %v285 = vmul.f32 %v207, %v277
    %v286 = vmul.f32 %v210, %v280
    %v287 = vadd.f32 %v283, %v284
    %v288 = vadd.f32 %v287, %v285
    %v289 = vadd.f32 %v288, %v286
    %v290 = vrot.slane %v289, 4
    %v291 = vadd.f32 %v289, %v290
    %v292 = vrot.slane %v291, 2
    %v293 = vadd.f32 %v291, %v292
    %v294 = vrot.slane %v293, 1
    %v295 = vadd.f32 %v293, %v294
    %296 = vst [vmem:[#allocation8] sm:$0x1] %v295
    // Predicated region
    $region30: #{tpu_custom_call.1} parent=1 // pred_check
      _
    $region31: #{tpu_custom_call.1} parent=1 // pred_check_branch
      %298 = sbr.rel (0) target = $region33
    $region32: #{tpu_custom_call.1} parent=1 // pred_region
      %s300 = ssub.s32 16, 16
      %301 = vsyncadd [#allocation4], %s300
      %s303 = sshll.u32 [#allocation8], 4
      %s304 = int_to_ptr.vmem [resolvable:$true] %s303
      %306 = dma.vmem_to_hbm [thread:$0]  %s304, 16, %s4, [#allocation4]
    $region33: #{tpu_custom_call.1} parent=1 // pred_fallthru
      _
    // Predicated region
    $region34: #{tpu_custom_call.1} parent=1 // pred_check
      _
    $region35: #{tpu_custom_call.1} parent=1 // pred_check_branch
      %308 = sbr.rel (0) target = $region37
    $region36: #{tpu_custom_call.1} parent=1 // pred_region
      %309 = dma.done [#allocation4], 16
    $region37: #{tpu_custom_call.1} parent=1 // pred_fallthru
      _
    %310 = vsyncpa [#allocation3], 1
    %311 = vsyncpa [#allocation6], 1
    %312 = vsyncpa [#allocation4], 1

</llo_original>
